<compile_context>
chip_gen: v5e
topology: v5e:2x2
jax: 0.10.0
libtpu: 0.0.40
codegen_flags: <defaults>
</compile_context>

<pallas_src>
import functools

import jax
import jax.numpy as jnp
from jax.experimental import pallas as pl
from jax.experimental.pallas import tpu as pltpu


# ---------------------------------------------------------------------------
# Kernel 1: patch embedding + cls token + positional embedding (one batch/step)
# ---------------------------------------------------------------------------
def _embed_kernel(patches_ref,    # (1, N, patch_dim)  f32
                  w_ref,          # (patch_dim, D)     bf16
                  b_ref,          # (1, D)             f32
                  cls_ref,        # (1, D)             f32
                  pos_ref,        # (N+1, D)           f32
                  out_ref):       # (1, N+1, D)        f32
    pt = patches_ref[0].astype(jnp.bfloat16)
    emb = jnp.dot(pt, w_ref[...], preferred_element_type=jnp.float32) + b_ref[...]
    out_ref[0, 0:1, :] = (cls_ref[...] + pos_ref[0:1, :]).astype(out_ref.dtype)
    out_ref[0, 1:, :] = (emb + pos_ref[1:, :]).astype(out_ref.dtype)


# ---------------------------------------------------------------------------
# Kernel 2: fused DETRTransformer — one (batch, layer) pair per grid step
# ---------------------------------------------------------------------------
def _transformer_layer_kernel(x_ref,                       # (1, L, D)   f32
                              ln1g_ref, ln1b_ref,          # (1, 1, D)   f32
                              wqkv_ref,                    # (1, D, 3I)  bf16
                              wo_ref,                      # (1, H, dph, D) bf16
                              bo_ref,                      # (1, 1, D)   f32
                              ln2g_ref, ln2b_ref,          # (1, 1, D)   f32
                              w1_ref,                      # (1, D, Hmlp) bf16
                              b1_ref,                      # (1, 1, Hmlp) f32
                              w2_ref,                      # (1, Hmlp, D) bf16
                              b2_ref,                      # (1, 1, D)   f32
                              out_ref,                     # (1, L, D)   f32
                              xs_ref,                      # VMEM (L, D) f32 scratch
                              *, num_heads, dim_per_head, scale):
    d_idx = pl.program_id(1)
    n_layers = pl.num_programs(1)
    L, D = xs_ref.shape
    H, dph = num_heads, dim_per_head
    inner = H * dph
    cdt = jnp.bfloat16
    eps = 1e-5  # nn.LayerNorm default

    # Load the residual stream into the persistent f32 accumulator once per b.
    @pl.when(d_idx == 0)
    def _():
        xs_ref[...] = x_ref[0].astype(jnp.float32)

    def layernorm(v, g, b):
        mu = jnp.mean(v, axis=-1, keepdims=True)
        var = jnp.mean((v - mu) ** 2, axis=-1, keepdims=True)
        return (v - mu) * jax.lax.rsqrt(var + eps) * g + b

    x = xs_ref[...]                                           # (L, D) f32

    # -------------------- i. PreNorm + SelfAttention --------------------
    xn = layernorm(x, ln1g_ref[0], ln1b_ref[0])
    qkv = jnp.dot(xn.astype(cdt), wqkv_ref[0],
                  preferred_element_type=jnp.float32)          # (L, 3*inner) f32

    # head-batched q/k/v: (H, L, dph); scale folded into q (cheaper than (L,L))
    q = jnp.stack([qkv[:, h * dph:(h + 1) * dph] for h in range(H)], axis=0) * scale
    k = jnp.stack([qkv[:, inner + h * dph:inner + (h + 1) * dph]
                   for h in range(H)], axis=0)
    v = jnp.stack([qkv[:, 2 * inner + h * dph:2 * inner + (h + 1) * dph]
                   for h in range(H)], axis=0)

    s = jnp.einsum('hld,hmd->hlm', q.astype(cdt), k.astype(cdt),
                   preferred_element_type=jnp.float32)         # (H, L, L)
    s = s - jnp.max(s, axis=-1, keepdims=True)
    p = jnp.exp(s)
    attn = p * pl.reciprocal(jnp.sum(p, axis=-1, keepdims=True), approx=True)
    z = jnp.einsum('hlm,hmd->hld', attn.astype(cdt), v.astype(cdt),
                   preferred_element_type=jnp.float32)         # (H, L, dph)

    # output projection: per-head batched matmul against wo (H, dph, D), summed
    zo = jnp.einsum('hld,hde->hle', z.astype(cdt), wo_ref[0],
                    preferred_element_type=jnp.float32)        # (H, L, D)
    attn_out = jnp.sum(zo, axis=0) + bo_ref[0]
    x = x + attn_out                                           # residual

    # -------------------- ii. PreNorm + FFN --------------------
    xn2 = layernorm(x, ln2g_ref[0], ln2b_ref[0])
    h1 = jnp.dot(xn2.astype(cdt), w1_ref[0],
                 preferred_element_type=jnp.float32) + b1_ref[0]
    h1 = jax.nn.gelu(h1, approximate=False)                    # exact GELU (PyTorch default)
    ff = jnp.dot(h1.astype(cdt), w2_ref[0],
                 preferred_element_type=jnp.float32) + b2_ref[0]
    x = x + ff                                                 # residual

    xs_ref[...] = x

    @pl.when(d_idx == n_layers - 1)
    def _():
        out_ref[0] = xs_ref[...].astype(out_ref.dtype)


# ---------------------------------------------------------------------------
# Kernel 3: mlp_head = LayerNorm + Linear on the pooled cls token
# ---------------------------------------------------------------------------
def _head_kernel(x_ref, g_ref, b_ref, w_ref, bh_ref, o_ref):
    x = x_ref[...].astype(jnp.float32)                         # (B, D)
    mu = jnp.mean(x, axis=-1, keepdims=True)
    var = jnp.mean((x - mu) ** 2, axis=-1, keepdims=True)
    xn = (x - mu) * jax.lax.rsqrt(var + 1e-5) * g_ref[...] + b_ref[...]
    o_ref[...] = (jnp.dot(xn.astype(jnp.bfloat16), w_ref[...],
                          preferred_element_type=jnp.float32)
                  + bh_ref[...]).astype(o_ref.dtype)


# ---------------------------------------------------------------------------
# Wrapper: full ViT forward
# ---------------------------------------------------------------------------
def vit_forward(x_img, p, *, patch_size, num_heads, dim_per_head):
    B, C, Hh, Ww = x_img.shape
    ph = pw = patch_size
    Hp, Wp = Hh // ph, Ww // pw
    N = Hp * Wp
    patch_dim = C * ph * pw
    D = p['w_embed'].shape[1]
    L = N + 1
    inner = num_heads * dim_per_head
    mlp_dim = p['w1'].shape[2]
    depth = p['wqkv'].shape[0]
    num_classes = p['w_head'].shape[1]
    scale = dim_per_head ** (-0.5)

    # i. Patch partition (pure layout; same view/permute/reshape as PyTorch)
    patches = (x_img.reshape(B, C, Hp, ph, Wp, pw)
               .transpose(0, 2, 4, 3, 5, 1)
               .reshape(B, N, patch_dim))

    # ii. Patch embedding + cls token + pos embedding
    tokens = pl.pallas_call(
        _embed_kernel,
        out_shape=jax.ShapeDtypeStruct((B, L, D), jnp.float32),
        grid=(B,),
        in_specs=[
            pl.BlockSpec((1, N, patch_dim), lambda b: (b, 0, 0)),
            pl.BlockSpec((patch_dim, D), lambda b: (0, 0)),
            pl.BlockSpec((1, D), lambda b: (0, 0)),
            pl.BlockSpec((1, D), lambda b: (0, 0)),
            pl.BlockSpec((L, D), lambda b: (0, 0)),
        ],
        out_specs=pl.BlockSpec((1, L, D), lambda b: (b, 0, 0)),
        compiler_params=pltpu.CompilerParams(dimension_semantics=("parallel",)),
    )(patches, p['w_embed'], p['b_embed'], p['cls'], p['pos'])

    # iii. Transformer encoder: all layers fused into one pallas_call
    kern = functools.partial(_transformer_layer_kernel,
                             num_heads=num_heads, dim_per_head=dim_per_head,
                             scale=scale)
    enc = pl.pallas_call(
        kern,
        out_shape=jax.ShapeDtypeStruct((B, L, D), jnp.float32),
        grid=(B, depth),
        in_specs=[
            pl.BlockSpec((1, L, D), lambda b, d: (b, 0, 0)),                  # x
            pl.BlockSpec((1, 1, D), lambda b, d: (d, 0, 0)),                  # ln1g
            pl.BlockSpec((1, 1, D), lambda b, d: (d, 0, 0)),                  # ln1b
            pl.BlockSpec((1, D, 3 * inner), lambda b, d: (d, 0, 0)),          # wqkv
            pl.BlockSpec((1, num_heads, dim_per_head, D),
                         lambda b, d: (d, 0, 0, 0)),                          # wo
            pl.BlockSpec((1, 1, D), lambda b, d: (d, 0, 0)),                  # bo
            pl.BlockSpec((1, 1, D), lambda b, d: (d, 0, 0)),                  # ln2g
            pl.BlockSpec((1, 1, D), lambda b, d: (d, 0, 0)),                  # ln2b
            pl.BlockSpec((1, D, mlp_dim), lambda b, d: (d, 0, 0)),            # w1
            pl.BlockSpec((1, 1, mlp_dim), lambda b, d: (d, 0, 0)),            # b1
            pl.BlockSpec((1, mlp_dim, D), lambda b, d: (d, 0, 0)),            # w2
            pl.BlockSpec((1, 1, D), lambda b, d: (d, 0, 0)),                  # b2
        ],
        out_specs=pl.BlockSpec((1, L, D), lambda b, d: (b, 0, 0)),
        scratch_shapes=[pltpu.VMEM((L, D), jnp.float32)],
        compiler_params=pltpu.CompilerParams(
            dimension_semantics=("parallel", "arbitrary"),
            vmem_limit_bytes=32 * 1024 * 1024),
    )(tokens, p['ln1g'], p['ln1b'], p['wqkv'], p['wo'], p['bo'],
      p['ln2g'], p['ln2b'], p['w1'], p['b1'], p['w2'], p['b2'])

    # iv. cls pooling (pure indexing) + v. classification head
    pooled = enc[:, 0, :]
    logits = pl.pallas_call(
        _head_kernel,
        out_shape=jax.ShapeDtypeStruct((B, num_classes), jnp.float32),
        grid=(1,),
        in_specs=[
            pl.BlockSpec((B, D), lambda i: (0, 0)),
            pl.BlockSpec((1, D), lambda i: (0, 0)),
            pl.BlockSpec((1, D), lambda i: (0, 0)),
            pl.BlockSpec((D, num_classes), lambda i: (0, 0)),
            pl.BlockSpec((1, num_classes), lambda i: (0, 0)),
        ],
        out_specs=pl.BlockSpec((B, num_classes), lambda i: (0, 0)),
    )(pooled, p['ln_hg'], p['ln_hb'], p['w_head'], p['b_head'])
    return logits


# ---------------------------------------------------------------------------
# Deterministic parameter construction (synthetic init; shapes from __init__)
# ---------------------------------------------------------------------------
def make_params(key, *, depth, dim, mlp_dim, num_heads, dim_per_head,
                patch_dim, num_patches, num_classes):
    inner = num_heads * dim_per_head
    wdt = jnp.bfloat16
    ks = jax.random.split(key, 12)
    p = {}
    p['w_embed'] = (0.05 * jax.random.normal(ks[0], (patch_dim, dim), jnp.float32)).astype(wdt)
    p['b_embed'] = 0.02 * jax.random.normal(ks[1], (1, dim), jnp.float32)
    p['cls'] = 0.02 * jax.random.normal(ks[2], (1, dim), jnp.float32)
    p['pos'] = 0.02 * jax.random.normal(ks[3], (num_patches + 1, dim), jnp.float32)
    p['ln1g'] = jnp.ones((depth, 1, dim), jnp.float32)
    p['ln1b'] = jnp.zeros((depth, 1, dim), jnp.float32)
    p['wqkv'] = (0.05 * jax.random.normal(ks[4], (depth, dim, 3 * inner), jnp.float32)).astype(wdt)
    p['wo'] = (0.05 * jax.random.normal(
        ks[5], (depth, num_heads, dim_per_head, dim), jnp.float32)).astype(wdt)
    p['bo'] = 0.02 * jax.random.normal(ks[6], (depth, 1, dim), jnp.float32)
    p['ln2g'] = jnp.ones((depth, 1, dim), jnp.float32)
    p['ln2b'] = jnp.zeros((depth, 1, dim), jnp.float32)
    p['w1'] = (0.05 * jax.random.normal(ks[7], (depth, dim, mlp_dim), jnp.float32)).astype(wdt)
    p['b1'] = 0.02 * jax.random.normal(ks[8], (depth, 1, mlp_dim), jnp.float32)
    p['w2'] = (0.05 * jax.random.normal(ks[9], (depth, mlp_dim, dim), jnp.float32)).astype(wdt)
    p['b2'] = 0.02 * jax.random.normal(ks[10], (depth, 1, dim), jnp.float32)
    p['ln_hg'] = jnp.ones((1, dim), jnp.float32)
    p['ln_hb'] = jnp.zeros((1, dim), jnp.float32)
    p['w_head'] = (0.05 * jax.random.normal(ks[11], (dim, num_classes), jnp.float32)).astype(wdt)
    p['b_head'] = jnp.zeros((1, num_classes), jnp.float32)
    return p


# ---------------------------------------------------------------------------
# Pure-JAX reference (mirrors the PyTorch forward; bf16 operands, f32 accum)
# ---------------------------------------------------------------------------
def reference(x_img, p, *, patch_size, num_heads, dim_per_head):
    B, C, Hh, Ww = x_img.shape
    ph = pw = patch_size
    Hp, Wp = Hh // ph, Ww // pw
    N = Hp * Wp
    patch_dim = C * ph * pw
    H, dph = num_heads, dim_per_head
    inner = H * dph
    scale = dph ** (-0.5)
    cdt = jnp.bfloat16

    def mm(a, b):
        return jnp.dot(a.astype(cdt), b.astype(cdt), preferred_element_type=jnp.float32)

    def ln(v, g, b):
        mu = jnp.mean(v, -1, keepdims=True)
        var = jnp.mean((v - mu) ** 2, -1, keepdims=True)
        return (v - mu) / jnp.sqrt(var + 1e-5) * g + b

    patches = (x_img.reshape(B, C, Hp, ph, Wp, pw)
               .transpose(0, 2, 4, 3, 5, 1)
               .reshape(B, N, patch_dim))
    tokens = mm(patches, p['w_embed']) + p['b_embed']
    D = tokens.shape[-1]
    cls = jnp.broadcast_to(p['cls'][None], (B, 1, D))
    x = jnp.concatenate([cls, tokens], axis=1) + p['pos'][None]

    depth = p['wqkv'].shape[0]
    L = x.shape[1]
    for d in range(depth):
        xn = ln(x, p['ln1g'][d], p['ln1b'][d])
        qkv = mm(xn, p['wqkv'][d])                                     # (B, L, 3*inner)
        q = qkv[..., 0:inner].reshape(B, L, H, dph).transpose(0, 2, 1, 3) * scale
        k = qkv[..., inner:2 * inner].reshape(B, L, H, dph).transpose(0, 2, 1, 3)
        v = qkv[..., 2 * inner:3 * inner].reshape(B, L, H, dph).transpose(0, 2, 1, 3)
        s = jnp.einsum('bhld,bhmd->bhlm', q.astype(cdt), k.astype(cdt),
                       preferred_element_type=jnp.float32)
        s = s - jnp.max(s, -1, keepdims=True)
        pr = jnp.exp(s)
        attn = pr / jnp.sum(pr, -1, keepdims=True)
        z = jnp.einsum('bhlm,bhmd->bhld', attn.astype(cdt), v.astype(cdt),
                       preferred_element_type=jnp.float32)
        z = z.transpose(0, 2, 1, 3).reshape(B, L, inner)
        wo2d = p['wo'][d].reshape(inner, D)
        x = x + (mm(z, wo2d) + p['bo'][d])
        xn2 = ln(x, p['ln2g'][d], p['ln2b'][d])
        hh = jax.nn.gelu(mm(xn2, p['w1'][d]) + p['b1'][d], approximate=False)
        x = x + (mm(hh, p['w2'][d]) + p['b2'][d])

    pooled = x[:, 0]
    pooled = ln(pooled, p['ln_hg'], p['ln_hb'])
    return mm(pooled, p['w_head']) + p['b_head']


if __name__ == "__main__":
    # Small shapes consistent with the module: image 16x16, patch 4, channels 3,
    # dim=32, mlp_dim=64, depth=2, num_heads=4, dim_per_head=8, classes=10.
    B = 2
    image_size, patch_size, channels = 16, 4, 3
    dim, mlp_dim = 32, 64
    depth, num_heads, dim_per_head = 2, 4, 8
    num_classes = 10

    num_patches = (image_size // patch_size) ** 2
    patch_dim = channels * patch_size * patch_size

    key = jax.random.PRNGKey(0)
    kx, kp = jax.random.split(key)
    x_img = jax.random.normal(kx, (B, channels, image_size, image_size), jnp.float32)
    params = make_params(kp, depth=depth, dim=dim, mlp_dim=mlp_dim,
                         num_heads=num_heads, dim_per_head=dim_per_head,
                         patch_dim=patch_dim, num_patches=num_patches,
                         num_classes=num_classes)

    logits = vit_forward(x_img, params, patch_size=patch_size,
                         num_heads=num_heads, dim_per_head=dim_per_head)
    logits = jax.block_until_ready(logits)

    ref = reference(x_img, params, patch_size=patch_size,
                    num_heads=num_heads, dim_per_head=dim_per_head)
    assert logits.shape == (B, num_classes)
    err = jnp.max(jnp.abs(logits - ref))
    assert jnp.allclose(logits, ref, atol=1e-2, rtol=1e-2), f"max err {err}"
    print("KERNEL_OK")
</pallas_src>

<mosaic_0001>
module attributes {stable_mosaic.version = 11 : i64} {
  func.func @_embed_kernel(%arg0: i32, %arg1: memref<1x16x48xf32, #tpu.memory_space<vmem>>, %arg2: memref<48x32xbf16, #tpu.memory_space<vmem>>, %arg3: memref<1x32xf32, #tpu.memory_space<vmem>>, %arg4: memref<1x32xf32, #tpu.memory_space<vmem>>, %arg5: memref<17x32xf32, #tpu.memory_space<vmem>>, %arg6: memref<1x17x32xf32, #tpu.memory_space<vmem>>) attributes {dimension_semantics = [#tpu.dimension_semantics<parallel>], iteration_bounds = array<i64: 2>, scalar_prefetch = 0 : i64, scratch_operands = 0 : i64, tpu.core_type = #tpu.core_type<tc>, window_params = [{transform_indices = @transform_0, window_bounds = array<i64: 1, 16, 48>}, {pipeline_mode = #tpu.pipeline_mode<synchronous>, transform_indices = @transform_1, window_bounds = array<i64: 48, 32>}, {pipeline_mode = #tpu.pipeline_mode<synchronous>, transform_indices = @transform_2, window_bounds = array<i64: 1, 32>}, {pipeline_mode = #tpu.pipeline_mode<synchronous>, transform_indices = @transform_3, window_bounds = array<i64: 1, 32>}, {pipeline_mode = #tpu.pipeline_mode<synchronous>, transform_indices = @transform_4, window_bounds = array<i64: 17, 32>}, {transform_indices = @transform_5, window_bounds = array<i64: 1, 17, 32>}]} {
    %c0 = arith.constant 0 : index
    %c0_0 = arith.constant 0 : index
    %c0_1 = arith.constant 0 : index
    %0 = vector.load %arg1[%c0, %c0_0, %c0_1] : memref<1x16x48xf32, #tpu.memory_space<vmem>>, vector<1x16x48xf32>
    %1 = vector.shape_cast %0 : vector<1x16x48xf32> to vector<16x48xf32>
    %2 = arith.truncf %1 : vector<16x48xf32> to vector<16x48xbf16>
    %c0_2 = arith.constant 0 : index
    %c0_3 = arith.constant 0 : index
    %3 = vector.load %arg2[%c0_2, %c0_3] : memref<48x32xbf16, #tpu.memory_space<vmem>>, vector<48x32xbf16>
    %cst = arith.constant dense<0.000000e+00> : vector<16x32xf32>
    %4 = tpu.matmul %2, %3, %cst {dimension_numbers = #tpu.dot_dimension_numbers<[1], [0], [0], [1], [0, 0, 1, 1], [], []>} : vector<16x48xbf16>, vector<48x32xbf16>, vector<16x32xf32> -> vector<16x32xf32>
    %c0_4 = arith.constant 0 : index
    %c0_5 = arith.constant 0 : index
    %5 = vector.load %arg3[%c0_4, %c0_5] : memref<1x32xf32, #tpu.memory_space<vmem>>, vector<1x32xf32>
    %6 = vector.broadcast %5 : vector<1x32xf32> to vector<16x32xf32>
    %7 = arith.addf %4, %6 : vector<16x32xf32>
    %c0_6 = arith.constant 0 : index
    %c0_7 = arith.constant 0 : index
    %8 = vector.load %arg4[%c0_6, %c0_7] : memref<1x32xf32, #tpu.memory_space<vmem>>, vector<1x32xf32>
    %c0_8 = arith.constant 0 : index
    %c0_9 = arith.constant 0 : index
    %9 = vector.load %arg5[%c0_8, %c0_9] : memref<17x32xf32, #tpu.memory_space<vmem>>, vector<1x32xf32>
    %10 = arith.addf %8, %9 : vector<1x32xf32>
    %c0_10 = arith.constant 0 : index
    %c0_11 = arith.constant 0 : index
    %c0_12 = arith.constant 0 : index
    %11 = vector.load %arg6[%c0_10, %c0_11, %c0_12] : memref<1x17x32xf32, #tpu.memory_space<vmem>>, vector<1x1x32xf32>
    %12 = vector.shape_cast %11 : vector<1x1x32xf32> to vector<1x32xf32>
    %13 = vector.shape_cast %10 : vector<1x32xf32> to vector<1x1x32xf32>
    tpu.vector_store %arg6[%c0_10, %c0_11, %c0_12], %13 {strides = array<i32>} : memref<1x17x32xf32, #tpu.memory_space<vmem>>, vector<1x1x32xf32>,
    %c1 = arith.constant 1 : index
    %c0_13 = arith.constant 0 : index
    %14 = vector.load %arg5[%c1, %c0_13] : memref<17x32xf32, #tpu.memory_space<vmem>>, vector<16x32xf32>
    %15 = arith.addf %7, %14 : vector<16x32xf32>
    %c0_14 = arith.constant 0 : index
    %c1_15 = arith.constant 1 : index
    %c0_16 = arith.constant 0 : index
    %16 = vector.load %arg6[%c0_14, %c1_15, %c0_16] : memref<1x17x32xf32, #tpu.memory_space<vmem>>, vector<1x16x32xf32>
    %17 = vector.shape_cast %16 : vector<1x16x32xf32> to vector<16x32xf32>
    %18 = vector.shape_cast %15 : vector<16x32xf32> to vector<1x16x32xf32>
    tpu.vector_store %arg6[%c0_14, %c1_15, %c0_16], %18 {strides = array<i32>} : memref<1x17x32xf32, #tpu.memory_space<vmem>>, vector<1x16x32xf32>,
    return
  }
  func.func @transform_0(%arg0: i32) -> (i32, i32, i32) {
    %c0_i32 = arith.constant 0 : i32
    %c0_i32_0 = arith.constant 0 : i32
    %c0_i32_1 = arith.constant 0 : i32
    return %arg0, %c0_i32, %c0_i32_0 : i32, i32, i32
  }
  func.func @transform_1(%arg0: i32) -> (i32, i32) {
    %c0_i32 = arith.constant 0 : i32
    %c0_i32_0 = arith.constant 0 : i32
    %c0_i32_1 = arith.constant 0 : i32
    return %c0_i32, %c0_i32_0 : i32, i32
  }
  func.func @transform_2(%arg0: i32) -> (i32, i32) {
    %c0_i32 = arith.constant 0 : i32
    %c0_i32_0 = arith.constant 0 : i32
    %c0_i32_1 = arith.constant 0 : i32
    return %c0_i32, %c0_i32_0 : i32, i32
  }
  func.func @transform_3(%arg0: i32) -> (i32, i32) {
    %c0_i32 = arith.constant 0 : i32
    %c0_i32_0 = arith.constant 0 : i32
    %c0_i32_1 = arith.constant 0 : i32
    return %c0_i32, %c0_i32_0 : i32, i32
  }
  func.func @transform_4(%arg0: i32) -> (i32, i32) {
    %c0_i32 = arith.constant 0 : i32
    %c0_i32_0 = arith.constant 0 : i32
    %c0_i32_1 = arith.constant 0 : i32
    return %c0_i32, %c0_i32_0 : i32, i32
  }
  func.func @transform_5(%arg0: i32) -> (i32, i32, i32) {
    %c0_i32 = arith.constant 0 : i32
    %c0_i32_0 = arith.constant 0 : i32
    %c0_i32_1 = arith.constant 0 : i32
    return %arg0, %c0_i32, %c0_i32_0 : i32, i32, i32
  }
}

</mosaic_0001>

<llo_original>
// kernel: tpu_custom_call.1
$region0: #{tpu_custom_call.1}
  #allocation0 [shape = 'u32[]', space=smem, size = 0x4, offset = 0x4, fixed_abs, tag = 'smem constant byte address 0x4 - core index']
  #allocation1 [shape = 'u32[72,128]{1,0:T(1,128)}', space=vmem, size = 0x9000, scoped, tag = 'internal scratch']
  %s0 = inlined_call_operand.vmem [shape: f32[2,16,48], index: 0, kind: input, shape index: {}]
  %s1 = inlined_call_operand.vmem [shape: bf16[48,32], index: 1, kind: input, shape index: {}]
  %s2 = inlined_call_operand.vmem [shape: f32[1,32], index: 2, kind: input, shape index: {}]
  %s3 = inlined_call_operand.vmem [shape: f32[1,32], index: 3, kind: input, shape index: {}]
  %s4 = inlined_call_operand.hbm [shape: f32[17,32], index: 4, kind: input, shape index: {}]
  %s5 = inlined_call_operand.vmem [shape: f32[2,17,32], index: 5, kind: output, shape index: {}]
  %s6 = sld [smem:[#allocation0]]
  $region57: #{tpu_custom_call.1} parent=0
    _
  %s8 = ssub.s32 1, %s6
  %s9 = scalar_select 0, %s8, %s6
  $region1: #{tpu_custom_call.1} parent=0
    #allocation2 [shape = 'u8[12288]{0}', space=vmem, size = 0x3000, scoped, tag = 'input window, operand 4, single buffered']
    #allocation3 [shape = 's32[2]{0}', space=sflag, size = 0x8, scoped, tag = 'scoped memory for tpu_custom_call.1']
    %10 = vsyncpa [#allocation3], 0
    loop: start=0, step=1, limit=4
    $region2: #{tpu_custom_call.1} parent=1 // loop_pre_header
      _
    $region3: #{tpu_custom_call.1} parent=1 // loop_header
      %s12 = sphi 0, %s16
      %p13 = scmp.ge.s32.totalorder %s12, 4
      %s22 = sphi 0, %s24
      %s25 = sphi 0, %s22
      %s26 = sphi 0, %s25
      %s42 = sphi 0, %s26
      %s46 = sphi 0, %s46
      %s48 = sphi 0, %s46
      %s49 = sphi 0, %s48
      %s63 = sphi 0, %s49
      %s67 = sphi 0, %s67
      %s69 = sphi 0, %s67
      %s70 = sphi 0, %s69
      %s84 = sphi 0, %s70
      %s88 = sphi 0, %s88
      %s90 = sphi 0, %s88
      %s91 = sphi 0, %s90
      %s105 = sphi 0, %s91
      %s109 = sphi 0, %s109
      %s111 = sphi 0, %s109
      %s112 = sphi 0, %s111
      %s126 = sphi 0, %s112
      %s132 = sphi 0, %s134
      %s135 = sphi 0, %s132
      %s136 = sphi 0, %s135
      %s152 = sphi 0, %s136
    $region4: #{tpu_custom_call.1} parent=1 // loop_header_branch
      %15 = sbr.rel (%p13) target = $region8
    $region5: #{tpu_custom_call.1} parent=1 // loop_body
      %s17 = ssub.s32 %s12, 1
      %s18 = ssub.s32 %s12, 2
      %s19 = sadd.s32 %s12, 1
      %s20 = ssub.s32 %s12, %s19
      %p21 = scmp.eq.s32.totalorder %s20, 0
      %s23 = sadd.s32 %s22, 1
      %s24 = scalar_select %p21, %s22, %s23
      %p27 = pneg %p21
      %p28 = scmp.eq.s32.totalorder %s12, 1
      %p29 = por %p27, %p28
      %p30 = scmp.ne.s32.totalorder %s22, %s25
      %p31 = scmp.eq.s32.totalorder %s12, 0
      %p32 = por %p30, %p31
      %p33 = scmp.ne.s32.totalorder %s22, %s25
      %p34 = scmp.eq.s32.totalorder %s17, 1
      %p35 = por %p33, %p34
      %p36 = scmp.ne.s32.totalorder %s25, %s26
      %p37 = scmp.eq.s32.totalorder %s17, 0
      %p38 = por %p36, %p37
      %p39 = scmp.ne.s32.totalorder %s25, %s26
      %p40 = scmp.eq.s32.totalorder %s18, 1
      %p41 = por %p39, %p40
      %p43 = scmp.ne.s32.totalorder %s26, %s42
      %p44 = scmp.eq.s32.totalorder %s18, 0
      %p45 = por %p43, %p44
      %s47 = sadd.s32 %s46, 1
      %p50 = scmp.eq.s32.totalorder %s12, 1
      %p51 = scmp.ne.s32.totalorder %s46, %s48
      %p52 = scmp.eq.s32.totalorder %s12, 0
      %p53 = por %p51, %p52
      %p54 = scmp.ne.s32.totalorder %s46, %s48
      %p55 = scmp.eq.s32.totalorder %s17, 1
      %p56 = por %p54, %p55
      %p57 = scmp.ne.s32.totalorder %s48, %s49
      %p58 = scmp.eq.s32.totalorder %s17, 0
      %p59 = por %p57, %p58
      %p60 = scmp.ne.s32.totalorder %s48, %s49
      %p61 = scmp.eq.s32.totalorder %s18, 1
      %p62 = por %p60, %p61
      %p64 = scmp.ne.s32.totalorder %s49, %s63
      %p65 = scmp.eq.s32.totalorder %s18, 0
      %p66 = por %p64, %p65
      %s68 = sadd.s32 %s67, 1
      %p71 = scmp.eq.s32.totalorder %s12, 1
      %p72 = scmp.ne.s32.totalorder %s67, %s69
      %p73 = scmp.eq.s32.totalorder %s12, 0
      %p74 = por %p72, %p73
      %p75 = scmp.ne.s32.totalorder %s67, %s69
      %p76 = scmp.eq.s32.totalorder %s17, 1
      %p77 = por %p75, %p76
      %p78 = scmp.ne.s32.totalorder %s69, %s70
      %p79 = scmp.eq.s32.totalorder %s17, 0
      %p80 = por %p78, %p79
      %p81 = scmp.ne.s32.totalorder %s69, %s70
      %p82 = scmp.eq.s32.totalorder %s18, 1
      %p83 = por %p81, %p82
      %p85 = scmp.ne.s32.totalorder %s70, %s84
      %p86 = scmp.eq.s32.totalorder %s18, 0
      %p87 = por %p85, %p86
      %s89 = sadd.s32 %s88, 1
      %p92 = scmp.eq.s32.totalorder %s12, 1
      %p93 = scmp.ne.s32.totalorder %s88, %s90
      %p94 = scmp.eq.s32.totalorder %s12, 0
      %p95 = por %p93, %p94
      %p96 = scmp.ne.s32.totalorder %s88, %s90
      %p97 = scmp.eq.s32.totalorder %s17, 1
      %p98 = por %p96, %p97
      %p99 = scmp.ne.s32.totalorder %s90, %s91
      %p100 = scmp.eq.s32.totalorder %s17, 0
      %p101 = por %p99, %p100
      %p102 = scmp.ne.s32.totalorder %s90, %s91
      %p103 = scmp.eq.s32.totalorder %s18, 1
      %p104 = por %p102, %p103
      %p106 = scmp.ne.s32.totalorder %s91, %s105
      %p107 = scmp.eq.s32.totalorder %s18, 0
      %p108 = por %p106, %p107
      %s110 = sadd.s32 %s109, 1
      %p113 = scmp.eq.s32.totalorder %s12, 1
      %p114 = scmp.ne.s32.totalorder %s109, %s111
      %p115 = scmp.eq.s32.totalorder %s12, 0
      %p116 = por %p114, %p115
      %p117 = scmp.ne.s32.totalorder %s109, %s111
      %p118 = scmp.eq.s32.totalorder %s17, 1
      %p119 = por %p117, %p118
      %p120 = scmp.ne.s32.totalorder %s111, %s112
      %p121 = scmp.eq.s32.totalorder %s17, 0
      %p122 = por %p120, %p121
      %p123 = scmp.ne.s32.totalorder %s111, %s112
      %p124 = scmp.eq.s32.totalorder %s18, 1
      %p125 = por %p123, %p124
      %p127 = scmp.ne.s32.totalorder %s112, %s126
      %p128 = scmp.eq.s32.totalorder %s18, 0
      %p129 = por %p127, %p128
      %s130 = ssub.s32 %s12, %s19
      %p131 = scmp.eq.s32.totalorder %s130, 0
      %s133 = sadd.s32 %s132, 1
      %s134 = scalar_select %p131, %s132, %s133
      %p137 = pneg %p131
      %p138 = scmp.eq.s32.totalorder %s12, 1
      %p139 = por %p137, %p138
      %p140 = scmp.ne.s32.totalorder %s132, %s135
      %p141 = scmp.eq.s32.totalorder %s12, 0
      %p142 = por %p140, %p141
      %p143 = scmp.ne.s32.totalorder %s132, %s135
      %p144 = scmp.eq.s32.totalorder %s17, 1
      %p145 = por %p143, %p144
      %p146 = scmp.ne.s32.totalorder %s135, %s136
      %p147 = scmp.eq.s32.totalorder %s17, 0
      %p148 = por %p146, %p147
      %p149 = scmp.ne.s32.totalorder %s135, %s136
      %p150 = scmp.eq.s32.totalorder %s18, 1
      %p151 = por %p149, %p150
      %p153 = scmp.ne.s32.totalorder %s136, %s152
      %p154 = scmp.eq.s32.totalorder %s18, 0
      %p155 = por %p153, %p154
      %p156 = scmp.le.s32.totalorder 1, %s12
      %p157 = scmp.lt.s32.totalorder %s12, 3
      %p158 = pnand %p156, %p157
      %p159 = pneg %p158
      // Predicated region
      $region9: #{tpu_custom_call.1} parent=5 // pred_check
        _
      $region10: #{tpu_custom_call.1} parent=5 // pred_check_branch
        %161 = sbr.rel (%p158) target = $region12
      $region11: #{tpu_custom_call.1} parent=5 // pred_region
        %s162 = ssub.s32 %s12, 1
        // Predicated region
        $region13: #{tpu_custom_call.1} parent=11 // pred_check
          %p163 = pneg %p59
        $region14: #{tpu_custom_call.1} parent=11 // pred_check_branch
          %165 = sbr.rel (%p163) target = $region16
        $region15: #{tpu_custom_call.1} parent=11 // pred_region
          _
        $region16: #{tpu_custom_call.1} parent=11 // pred_fallthru
          _
        // Predicated region
        $region17: #{tpu_custom_call.1} parent=11 // pred_check
          %p166 = pneg %p80
        $region18: #{tpu_custom_call.1} parent=11 // pred_check_branch
          %168 = sbr.rel (%p166) target = $region20
        $region19: #{tpu_custom_call.1} parent=11 // pred_region
          _
        $region20: #{tpu_custom_call.1} parent=11 // pred_fallthru
          _
        // Predicated region
        $region21: #{tpu_custom_call.1} parent=11 // pred_check
          %p169 = pneg %p101
        $region22: #{tpu_custom_call.1} parent=11 // pred_check_branch
          %171 = sbr.rel (%p169) target = $region24
        $region23: #{tpu_custom_call.1} parent=11 // pred_region
          _
        $region24: #{tpu_custom_call.1} parent=11 // pred_fallthru
          _
        // Predicated region
        $region25: #{tpu_custom_call.1} parent=11 // pred_check
          %p172 = pneg %p122
        $region26: #{tpu_custom_call.1} parent=11 // pred_check_branch
          %174 = sbr.rel (%p172) target = $region28
        $region27: #{tpu_custom_call.1} parent=11 // pred_region
          %176 = vsyncadd [#allocation3], 0
          %s177 = sshll.u32 %s4, 4
          %s178 = int_to_ptr.hbm [resolvable:$true] %s177
          %s179 = sshll.u32 [#allocation2], 4
          %s180 = int_to_ptr.vmem [resolvable:$true] %s179
          %185 = dma.hbm_to_vmem [thread:$0]  %s178, 384, %s180, [#allocation3], 128, 128, 8
        $region28: #{tpu_custom_call.1} parent=11 // pred_fallthru
          _
      $region12: #{tpu_custom_call.1} parent=5 // pred_fallthru
        _
      %p186 = scmp.lt.s32.totalorder %s12, 2
      // Predicated region
      $region29: #{tpu_custom_call.1} parent=5 // pred_check
        %p187 = pneg %p186
      $region30: #{tpu_custom_call.1} parent=5 // pred_check_branch
        %189 = sbr.rel (%p187) target = $region32
      $region31: #{tpu_custom_call.1} parent=5 // pred_region
        // Predicated region
        $region33: #{tpu_custom_call.1} parent=31 // pred_check
          %p190 = pneg %p32
        $region34: #{tpu_custom_call.1} parent=31 // pred_check_branch
          %192 = sbr.rel (%p190) target = $region36
        $region35: #{tpu_custom_call.1} parent=31 // pred_region
          %p193 = scmp.lt.s32.totalorder %s12, 1
          %s194 = scalar_select %p193, %s12, 1
          %s195 = smul.addr %s194, 2
          %s196 = smul.addr %s195, 8
          %s197 = scalar_lea.vmem %s0, %s196
        $region36: #{tpu_custom_call.1} parent=31 // pred_fallthru
          _
      $region32: #{tpu_custom_call.1} parent=5 // pred_fallthru
        _
      %p198 = scmp.le.s32.totalorder 1, %s12
      %p199 = scmp.lt.s32.totalorder %s12, 3
      %p200 = pnand %p198, %p199
      %p201 = pneg %p200
      // Predicated region
      $region37: #{tpu_custom_call.1} parent=5 // pred_check
        _
      $region38: #{tpu_custom_call.1} parent=5 // pred_check_branch
        %203 = sbr.rel (%p200) target = $region40
      $region39: #{tpu_custom_call.1} parent=5 // pred_region
        %s204 = ssub.s32 %s12, 1
        // Predicated region
        $region41: #{tpu_custom_call.1} parent=39 // pred_check
          %p205 = pneg %p122
        $region42: #{tpu_custom_call.1} parent=39 // pred_check_branch
          %207 = sbr.rel (%p205) target = $region44
        $region43: #{tpu_custom_call.1} parent=39 // pred_region
          %209 = dma.done [#allocation3], 384
        $region44: #{tpu_custom_call.1} parent=39 // pred_fallthru
          _
        %p210 = scmp.lt.s32.totalorder %s17, 1
        %s211 = scalar_select %p210, %s17, 1
        %s212 = smul.addr %s211, 2
        %s213 = smul.addr %s212, 8
        %s214 = scalar_lea.vmem %s0, %s213
        %p215 = pneg %p38
        %p216 = pneg %p35
        %p217 = pneg %p59
        %p218 = pneg %p56
        %p219 = pneg %p80
        %p220 = pneg %p77
        %p221 = pneg %p101
        %p222 = pneg %p98
        %p223 = pneg %p122
        %p224 = pneg %p119
        %p225 = pneg %p148
        %p226 = pneg %p145
        %p227 = scmp.lt.s32.totalorder %s17, 1
        %s228 = scalar_select %p227, %s17, 1
        %s229 = smul.addr %s228, 3
        %s230 = smul.addr %s229, 8
        %s231 = scalar_lea.vmem %s5, %s230
        %p232 = scmp.lt.s32.totalorder %s17, 1
        %s233 = scalar_select %p232, %s17, 1
        %s234 = smul.addr %s233, 2
        %s235 = smul.addr %s234, 8
        %s236 = scalar_lea.vmem %s0, %s235
        %p237 = scmp.lt.s32.totalorder %s17, 1
        %s238 = scalar_select %p237, %s17, 1
        %s239 = smul.addr %s238, 3
        %s240 = smul.addr %s239, 8
        %s241 = scalar_lea.vmem %s5, %s240
        %v243 = vld [vmem:[%s236] sm:$0xff]
        %v244 = vld [vmem:[%s236 + $0x8] sm:$0xff]
        %v245 = vpack.c.bf16 %v244, %v243
        %v246 = vld [vmem:[%s1] sm:$0xf]
        %v247 = vld [vmem:[%s1 + $0x4] sm:$0xf]
        %v248 = vld [vmem:[%s1 + $0x8] sm:$0xf]
        %v249 = vld [vmem:[%s1 + $0xc] sm:$0xf]
        %v250 = vld [vmem:[%s1 + $0x10] sm:$0xf]
        %v251 = vld [vmem:[%s1 + $0x14] sm:$0xf]
        %v252 = vld [vmem:[%s2] sm:$0x1]
        %v254 = vperm.slane %v252, 0
        %v262 = vunpack.c.l.b16 %v246
        %v263 = vunpack.c.l.b16 %v247
        %v264 = vunpack.c.l.b16 %v248
        %v265 = vunpack.c.l.b16 %v249
        %v266 = vunpack.c.l.b16 %v250
        %v267 = vunpack.c.l.b16 %v251
        %v268 = vpack.c.b16 %v263, %v262
        %v269 = vpack.c.b16 %v265, %v264
        %v270 = vpack.c.b16 %v267, %v266
        %vm274 = vcmask 392192
        %v276 = vsel %vm274, %v245, 0
        %278 = vmatpush.bf16.msra.mxu0 0
        %279 = vmatpush.bf16.msra.mxu0 0
        %280 = vmatpush.bf16.msra.mxu0 0
        %281 = vmatpush.bf16.msra.mxu0 0
        %282 = vmatpush.bf16.msra.mxu0 0
        %283 = vmatpush.bf16.msra.mxu0 %v270
        %284 = vmatpush.bf16.msra.mxu0 %v269
        %285 = vmatpush.bf16.msra.mxu0 %v268
        %286 = vmatmul.bf16.gmra.mxu0 %v276
        %v287 = vpop.f32.mrf.mxu0
        %v288 = vadd.f32 %v254, %v287
        %v289 = vpop.f32.mrf.mxu0
        %v290 = vadd.f32 %v254, %v289
        %291 = vdwg.mxu0
        %v292 = vld [vmem:[%s3] sm:$0x1]
        %v293 = vld [vmem:[#allocation2] sm:$0x1]
        %v294 = vadd.f32 %v292, %v293
        %vm295 = vcmask 253952
        %296 = vst.msk [vmem:[%s241] sm:$0x1] %vm295, %v294
        %v297 = vld [vmem:[#allocation2 + $0x1] sm:$0xff]
        %v298 = vld [vmem:[#allocation2 + $0x9] sm:$0xff]
        %v299 = vadd.f32 %v288, %v297
        %v300 = vadd.f32 %v290, %v298
        %vm301 = vcmask 261120
        %302 = vst.msk [vmem:[%s241 + $0x1] sm:$0xff] %vm301, %v299
        %303 = vst.msk [vmem:[%s241 + $0x9] sm:$0xff] %vm301, %v300
        %p304 = scmp.lt.s32.totalorder %s17, 1
        %s305 = scalar_select %p304, %s17, 1
        %s306 = smul.addr %s305, 3
        %s307 = smul.addr %s306, 8
        %s308 = scalar_lea.vmem %s5, %s307
        // Predicated region
        $region45: #{tpu_custom_call.1} parent=39 // pred_check
          %p309 = pneg %p145
        $region46: #{tpu_custom_call.1} parent=39 // pred_check_branch
          %311 = sbr.rel (%p309) target = $region48
        $region47: #{tpu_custom_call.1} parent=39 // pred_region
          _
        $region48: #{tpu_custom_call.1} parent=39 // pred_fallthru
          _
      $region40: #{tpu_custom_call.1} parent=5 // pred_fallthru
        _
      %p312 = scmp.le.s32.totalorder 2, %s12
      // Predicated region
      $region49: #{tpu_custom_call.1} parent=5 // pred_check
        %p313 = pneg %p312
      $region50: #{tpu_custom_call.1} parent=5 // pred_check_branch
        %315 = sbr.rel (%p313) target = $region52
      $region51: #{tpu_custom_call.1} parent=5 // pred_region
        %s316 = ssub.s32 %s12, 2
        // Predicated region
        $region53: #{tpu_custom_call.1} parent=51 // pred_check
          %p317 = pneg %p151
        $region54: #{tpu_custom_call.1} parent=51 // pred_check_branch
          %319 = sbr.rel (%p317) target = $region56
        $region55: #{tpu_custom_call.1} parent=51 // pred_region
          %p320 = scmp.lt.s32.totalorder %s18, 1
          %s321 = scalar_select %p320, %s18, 1
          %s322 = smul.addr %s321, 3
          %s323 = smul.addr %s322, 8
          %s324 = scalar_lea.vmem %s5, %s323
        $region56: #{tpu_custom_call.1} parent=51 // pred_fallthru
          _
      $region52: #{tpu_custom_call.1} parent=5 // pred_fallthru
        _
    $region6: #{tpu_custom_call.1} parent=1 // loop_footer
      %s16 = sadd.s32 1, %s12
    $region7: #{tpu_custom_call.1} parent=1 // loop_footer_branch
      %11 = sbr.rel target = $region3
    $region8: #{tpu_custom_call.1} parent=1 // loop_exit
      _
    %325 = vsyncpa [#allocation3], 1
    %s326 = scalar_lea.sflag [#allocation3], 1
    %327 = vsyncpa %s326, 1

</llo_original>
